<compile_context>
chip_gen: v7x
topology: tpu7x:2x2x1
jax: 0.10.0
libtpu: 0.0.40
codegen_flags: <defaults>
</compile_context>

<pallas_src>
import jax
import jax.numpy as jnp
from jax.experimental import pallas as pl
from jax.experimental.pallas import tpu as pltpu

block_size = 8   # max sequence length (causal mask size)
n_embd = 32      # embedding dim


def head_attention_kernel(x_ref, wkqv_ref, o_ref):
    """One batch-chunk per grid step.

    x_ref    : (BB, T, C)   VMEM tile
    wkqv_ref : (C, 3*H)     VMEM tile (fused [K | Q*scale | V] weights)
    o_ref    : (BB, T, H)   VMEM tile
    """
    BB, T, C = x_ref.shape
    H = o_ref.shape[-1]

    # --- fused projections: one MXU matmul (BB*T, C) x (C, 3H) ---------------
    x2d = x_ref[...].reshape(BB * T, C)
    kqv = jnp.dot(x2d, wkqv_ref[...], preferred_element_type=jnp.float32)
    kqv = kqv.reshape(BB, T, 3 * H)
    k = kqv[:, :, 0:H]          # (BB, T, H)
    q = kqv[:, :, H:2 * H]      # (BB, T, H)  -- already scaled by H**-0.5
    v = kqv[:, :, 2 * H:3 * H]  # (BB, T, H)

    # --- attention logits: batched contraction over H (no k.T materialized) --
    logits = jax.lax.dot_general(
        q, k,
        dimension_numbers=(((2,), (2,)), ((0,), (0,))),
        preferred_element_type=jnp.float32)            # (BB, T, T)

    # --- causal mask (row >= col kept) ---------------------------------------
    row = jax.lax.broadcasted_iota(jnp.int32, (BB, T, T), 1)
    col = jax.lax.broadcasted_iota(jnp.int32, (BB, T, T), 2)
    masked = jnp.where(row >= col, logits, -jnp.inf)

    # --- numerically stable softmax (EUP exp + EUP approx reciprocal) --------
    m = jnp.max(masked, axis=-1, keepdims=True)
    e = jnp.exp(masked - m)
    denom = jnp.sum(e, axis=-1, keepdims=True)
    wei = e * pl.reciprocal(denom, approx=True)        # (BB, T, T)

    # --- weighted sum of values (batched MXU matmul) -------------------------
    out = jax.lax.dot_general(
        wei, v,
        dimension_numbers=(((2,), (1,)), ((0,), (0,))),
        preferred_element_type=jnp.float32)            # (BB, T, H)

    o_ref[...] = out.astype(o_ref.dtype)


def head_forward(x, wk, wq, wv):
    """x: (B, T, C) f32;  wk/wq/wv: (C, H) f32.  Returns (B, T, H) f32."""
    B, T, C = x.shape
    H = wk.shape[1]

    # Fold the attention scale into the query weights and fuse K/Q/V weights
    # into a single (C, 3H) matrix (one MXU push per grid step).
    scale = jnp.float32(H) ** jnp.float32(-0.5)
    wkqv = jnp.concatenate([wk, wq * scale, wv], axis=1)   # (C, 3H)

    # Process the whole (small) batch in one grid step; for large B this chunk
    # size would be re-derived against VMEM (v7x: 64 MiB) and split >=2-way for
    # the two v7x TensorCores via the "parallel" grid axis.
    batch_block = B
    grid = (pl.cdiv(B, batch_block),)

    grid_spec = pltpu.PrefetchScalarGridSpec(
        num_scalar_prefetch=0,
        grid=grid,
        in_specs=[
            pl.BlockSpec((batch_block, T, C), lambda b: (b, 0, 0)),
            pl.BlockSpec((C, 3 * H), lambda b: (0, 0)),
        ],
        out_specs=pl.BlockSpec((batch_block, T, H), lambda b: (b, 0, 0)),
    )

    return pl.pallas_call(
        head_attention_kernel,
        out_shape=jax.ShapeDtypeStruct((B, T, H), jnp.float32),
        grid_spec=grid_spec,
        compiler_params=pltpu.CompilerParams(
            dimension_semantics=("parallel",)),
    )(x, wkqv)


def reference_head(x, wk, wq, wv):
    """Pure-JAX reference mirroring the PyTorch forward pass."""
    B, T, C = x.shape
    H = wk.shape[1]
    k = x @ wk
    q = x @ wq
    v = x @ wv
    logits = (q @ jnp.swapaxes(k, -2, -1)) * (H ** -0.5)
    tril = jnp.tril(jnp.ones((block_size, block_size)))
    logits = jnp.where(tril[:T, :T] == 0, -jnp.inf, logits)
    wei = jax.nn.softmax(logits, axis=-1)
    return wei @ v


if __name__ == "__main__":
    key = jax.random.PRNGKey(0)
    kx, kk, kq, kv = jax.random.split(key, 4)

    B, T, C = 2, block_size, n_embd     # (2, 8, 32)
    head_size = 16

    x = jax.random.normal(kx, (B, T, C), dtype=jnp.float32)
    # Deterministic parameter init (nn.Linear-like scale: U(-1/sqrt(C), 1/sqrt(C)))
    bound = 1.0 / (C ** 0.5)
    wk = jax.random.uniform(kk, (C, head_size), jnp.float32, -bound, bound)
    wq = jax.random.uniform(kq, (C, head_size), jnp.float32, -bound, bound)
    wv = jax.random.uniform(kv, (C, head_size), jnp.float32, -bound, bound)

    out = head_forward(x, wk, wq, wv)
    out = jax.block_until_ready(out)

    ref = reference_head(x, wk, wq, wv)
    assert out.shape == (B, T, head_size)
    # Tolerance relaxed slightly vs 1e-5 because the softmax denominator uses
    # the EUP approximate reciprocal (~2^-12 relative error); everything else
    # accumulates in f32.
    assert jnp.allclose(out, ref, atol=2e-3, rtol=2e-3), "mismatch vs reference"

    print("KERNEL_OK")
</pallas_src>

<mosaic_0001>
module attributes {stable_mosaic.version = 11 : i64} {
  func.func @head_attention_kernel(%arg0: i32, %arg1: memref<2x8x32xf32, #tpu.memory_space<vmem>>, %arg2: memref<32x48xf32, #tpu.memory_space<vmem>>, %arg3: memref<2x8x16xf32, #tpu.memory_space<vmem>>) attributes {dimension_semantics = [#tpu.dimension_semantics<parallel>], iteration_bounds = array<i64: 1>, scalar_prefetch = 0 : i64, scratch_operands = 0 : i64, tpu.core_type = #tpu.core_type<tc>, window_params = [{transform_indices = @transform_0, window_bounds = array<i64: 2, 8, 32>}, {pipeline_mode = #tpu.pipeline_mode<synchronous>, transform_indices = @transform_1, window_bounds = array<i64: 32, 48>}, {transform_indices = @transform_2, window_bounds = array<i64: 2, 8, 16>}]} {
    %c0 = arith.constant 0 : index
    %c0_0 = arith.constant 0 : index
    %c0_1 = arith.constant 0 : index
    %0 = vector.load %arg1[%c0, %c0_0, %c0_1] : memref<2x8x32xf32, #tpu.memory_space<vmem>>, vector<2x8x32xf32>
    %1 = vector.shape_cast %0 : vector<2x8x32xf32> to vector<16x32xf32>
    %c0_2 = arith.constant 0 : index
    %c0_3 = arith.constant 0 : index
    %2 = vector.load %arg2[%c0_2, %c0_3] : memref<32x48xf32, #tpu.memory_space<vmem>>, vector<32x48xf32>
    %cst = arith.constant dense<0.000000e+00> : vector<16x48xf32>
    %3 = tpu.matmul %1, %2, %cst {dimension_numbers = #tpu.dot_dimension_numbers<[1], [0], [0], [1], [0, 0, 1, 1], [], []>} : vector<16x32xf32>, vector<32x48xf32>, vector<16x48xf32> -> vector<16x48xf32>
    %4 = vector.shape_cast %3 : vector<16x48xf32> to vector<2x8x48xf32>
    %5 = vector.extract_strided_slice %4 {offsets = [0, 0, 0], sizes = [2, 8, 16], strides = [1, 1, 1]} : vector<2x8x48xf32> to vector<2x8x16xf32>
    %6 = vector.extract_strided_slice %4 {offsets = [0, 0, 16], sizes = [2, 8, 16], strides = [1, 1, 1]} : vector<2x8x48xf32> to vector<2x8x16xf32>
    %7 = vector.extract_strided_slice %4 {offsets = [0, 0, 32], sizes = [2, 8, 16], strides = [1, 1, 1]} : vector<2x8x48xf32> to vector<2x8x16xf32>
    %cst_4 = arith.constant dense<0.000000e+00> : vector<2x8x8xf32>
    %8 = tpu.matmul %6, %5, %cst_4 {dimension_numbers = #tpu.dot_dimension_numbers<[2], [2], [1], [1], [0, 0, 0, 1, 1, 1], [0], [0]>} : vector<2x8x16xf32>, vector<2x8x16xf32>, vector<2x8x8xf32> -> vector<2x8x8xf32>
    %9 = tpu.iota {dimensions = array<i32: 1>} : vector<2x8x8xi32>
    %10 = tpu.iota {dimensions = array<i32: 2>} : vector<2x8x8xi32>
    %11 = arith.cmpi sge, %9, %10 : vector<2x8x8xi32>
    %cst_5 = arith.constant 0xFF800000 : f32
    %12 = vector.broadcast %cst_5 : f32 to vector<2x8x8xf32>
    %13 = arith.select %11, %8, %12 : vector<2x8x8xi1>, vector<2x8x8xf32>
    %cst_6 = arith.constant dense<0xFF800000> : vector<2x8xf32>
    %14 = vector.multi_reduction <maximumf>, %13, %cst_6 [2] : vector<2x8x8xf32> to vector<2x8xf32>
    %15 = vector.shape_cast %14 : vector<2x8xf32> to vector<2x8x1xf32>
    %16 = vector.broadcast %15 : vector<2x8x1xf32> to vector<2x8x8xf32>
    %17 = arith.subf %13, %16 : vector<2x8x8xf32>
    %18 = math.exp %17 : vector<2x8x8xf32>
    %cst_7 = arith.constant dense<0.000000e+00> : vector<2x8xf32>
    %19 = vector.multi_reduction <add>, %18, %cst_7 [2] : vector<2x8x8xf32> to vector<2x8xf32>
    %20 = vector.shape_cast %19 : vector<2x8xf32> to vector<2x8x1xf32>
    %21 = tpu.reciprocal %20 {approx = true} : vector<2x8x1xf32> -> vector<2x8x1xf32>
    %22 = vector.broadcast %21 : vector<2x8x1xf32> to vector<2x8x8xf32>
    %23 = arith.mulf %18, %22 : vector<2x8x8xf32>
    %cst_8 = arith.constant dense<0.000000e+00> : vector<2x8x16xf32>
    %24 = tpu.matmul %23, %7, %cst_8 {dimension_numbers = #tpu.dot_dimension_numbers<[2], [1], [1], [2], [0, 0, 0, 1, 1, 2], [0], [0]>} : vector<2x8x8xf32>, vector<2x8x16xf32>, vector<2x8x16xf32> -> vector<2x8x16xf32>
    %c0_9 = arith.constant 0 : index
    %c0_10 = arith.constant 0 : index
    %c0_11 = arith.constant 0 : index
    %25 = vector.load %arg3[%c0_9, %c0_10, %c0_11] : memref<2x8x16xf32, #tpu.memory_space<vmem>>, vector<2x8x16xf32>
    tpu.vector_store %arg3[%c0_9, %c0_10, %c0_11], %24 {strides = array<i32>} : memref<2x8x16xf32, #tpu.memory_space<vmem>>, vector<2x8x16xf32>,
    return
  }
  func.func @transform_0(%arg0: i32) -> (i32, i32, i32) {
    %c0_i32 = arith.constant 0 : i32
    %c0_i32_0 = arith.constant 0 : i32
    %c0_i32_1 = arith.constant 0 : i32
    return %arg0, %c0_i32, %c0_i32_0 : i32, i32, i32
  }
  func.func @transform_1(%arg0: i32) -> (i32, i32) {
    %c0_i32 = arith.constant 0 : i32
    %c0_i32_0 = arith.constant 0 : i32
    %c0_i32_1 = arith.constant 0 : i32
    return %c0_i32, %c0_i32_0 : i32, i32
  }
  func.func @transform_2(%arg0: i32) -> (i32, i32, i32) {
    %c0_i32 = arith.constant 0 : i32
    %c0_i32_0 = arith.constant 0 : i32
    %c0_i32_1 = arith.constant 0 : i32
    return %arg0, %c0_i32, %c0_i32_0 : i32, i32, i32
  }
}

</mosaic_0001>

<llo_original>
// kernel: tpu_custom_call.1
$region0: #{tpu_custom_call.1}
  #allocation0 [shape = 'u32[]', space=smem, size = 0x4, offset = 0x4, fixed_abs, tag = 'smem constant byte address 0x4 - core index']
  #allocation1 [shape = 'u32[144,128]{1,0:T(1,128)}', space=vmem, size = 0x12000, scoped, tag = 'internal scratch']
  %s0 = inlined_call_operand.hbm [shape: f32[2,8,32], index: 0, kind: input, shape index: {}]
  %s1 = inlined_call_operand.hbm [shape: f32[32,48], index: 1, kind: input, shape index: {}]
  %s2 = inlined_call_operand.hbm [shape: f32[2,8,16], index: 2, kind: output, shape index: {}]
  %s3 = sld [smem:[#allocation0]]
  $region26: #{tpu_custom_call.1} parent=0
    _
  %s5 = ssub.s32 1, %s3
  %s6 = scalar_select 0, %s5, %s3
  $region1: #{tpu_custom_call.1} parent=0
    #allocation2 [shape = 'u8[8192]{0}', space=vmem, size = 0x2000, scoped, tag = 'input window, operand 0, single buffered']
    #allocation3 [shape = 's32[1]{0}', space=sflag, size = 0x4, scoped, tag = 'scoped memory for tpu_custom_call.1']
    #allocation4 [shape = 's32[1]{0}', space=sflag, size = 0x4, scoped, tag = 'scoped memory for tpu_custom_call.1']
    #allocation5 [shape = 'u8[16384]{0}', space=vmem, size = 0x4000, scoped, tag = 'input window, operand 1, single buffered']
    #allocation6 [shape = 's32[1]{0}', space=sflag, size = 0x4, scoped, tag = 'scoped memory for tpu_custom_call.1']
    #allocation7 [shape = 'u8[8192]{0}', space=vmem, size = 0x2000, scoped, tag = 'output window, operand 0, single buffered']
    %7 = vsyncpa [#allocation3], 0
    %8 = vsyncpa [#allocation6], 0
    %9 = vsyncpa [#allocation4], 0
    // Predicated region
    $region2: #{tpu_custom_call.1} parent=1 // pred_check
      _
    $region3: #{tpu_custom_call.1} parent=1 // pred_check_branch
      %11 = sbr.rel (0) target = $region5
    $region4: #{tpu_custom_call.1} parent=1 // pred_region
      %s13 = ssub.s32 256, 256
      %14 = vsyncadd [#allocation3], %s13
      %s15 = sshll.u32 [#allocation2], 4
      %s16 = int_to_ptr.vmem [resolvable:$true] %s15
      %21 = dma.hbm_to_vmem [thread:$0]  %s0, 256, %s16, [#allocation3], 128, 128, 8
    $region5: #{tpu_custom_call.1} parent=1 // pred_fallthru
      _
    // Predicated region
    $region6: #{tpu_custom_call.1} parent=1 // pred_check
      _
    $region7: #{tpu_custom_call.1} parent=1 // pred_check_branch
      %23 = sbr.rel (0) target = $region9
    $region8: #{tpu_custom_call.1} parent=1 // pred_region
      %s25 = ssub.s32 512, 512
      %26 = vsyncadd [#allocation6], %s25
      %s27 = sshll.u32 [#allocation5], 4
      %s28 = int_to_ptr.vmem [resolvable:$true] %s27
      %33 = dma.hbm_to_vmem [thread:$0]  %s1, 512, %s28, [#allocation6], 128, 128, 8
    $region9: #{tpu_custom_call.1} parent=1 // pred_fallthru
      _
    // Predicated region
    $region10: #{tpu_custom_call.1} parent=1 // pred_check
      _
    $region11: #{tpu_custom_call.1} parent=1 // pred_check_branch
      %35 = sbr.rel (0) target = $region13
    $region12: #{tpu_custom_call.1} parent=1 // pred_region
      %36 = dma.done [#allocation3], 256
    $region13: #{tpu_custom_call.1} parent=1 // pred_fallthru
      _
    // Predicated region
    $region14: #{tpu_custom_call.1} parent=1 // pred_check
      _
    $region15: #{tpu_custom_call.1} parent=1 // pred_check_branch
      %38 = sbr.rel (0) target = $region17
    $region16: #{tpu_custom_call.1} parent=1 // pred_region
      %39 = dma.done [#allocation6], 512
    $region17: #{tpu_custom_call.1} parent=1 // pred_fallthru
      _
    %v40 = vld [vmem:[#allocation2] sm:$0xff]
    %v41 = vld [vmem:[#allocation2 + $0x8] sm:$0xff]
    %v42 = vld [vmem:[#allocation5] sm:$0xff]
    %v43 = vld [vmem:[#allocation5 + $0x8] sm:$0xff]
    %v44 = vld [vmem:[#allocation5 + $0x10] sm:$0xff]
    %v45 = vld [vmem:[#allocation5 + $0x18] sm:$0xff]
    %vm46 = vcmask 261120
    %v48 = vsel %vm46, %v40, 0
    %v51 = vsel %vm46, %v41, 0
    %53 = vmatprep.subr.mxu0 0.0
    %54 = vmatpush1.msra.mxu0 %v42
    %55 = vmatprep.subr.mxu0 0.0
    %56 = vmatpush1.msra.mxu0 %v43
    %57 = vmatprep.subr.mxu0 0.0
    %58 = vmatpush1.msra.mxu0 %v44
    %59 = vmatprep.subr.mxu0 0.0
    %60 = vmatpush1.msra.mxu0 %v45
    %61 = vmatprep.subr.mxu0 0.0
    %62 = vmatpush1.msra.mxu0 0.0
    %63 = vmatprep.subr.mxu0 0.0
    %64 = vmatpush1.msra.mxu0 0.0
    %65 = vmatprep.subr.mxu0 0.0
    %66 = vmatpush1.msra.mxu0 0.0
    %67 = vmatprep.subr.mxu0 0.0
    %68 = vmatpush1.msra.mxu0 0.0
    %69 = vmatprep.subr.mxu0 0.0
    %70 = vmatpush1.msra.mxu0 0.0
    %71 = vmatprep.subr.mxu0 0.0
    %72 = vmatpush1.msra.mxu0 0.0
    %73 = vmatprep.subr.mxu0 0.0
    %74 = vmatpush1.msra.mxu0 0.0
    %75 = vmatprep.subr.mxu0 0.0
    %76 = vmatpush1.msra.mxu0 0.0
    %77 = vmatprep.subr.mxu0 0.0
    %78 = vmatpush1.msra.mxu0 0.0
    %79 = vmatprep.subr.mxu0 0.0
    %80 = vmatpush1.msra.mxu0 0.0
    %81 = vmatprep.subr.mxu0 0.0
    %82 = vmatpush1.msra.mxu0 0.0
    %83 = vmatprep.subr.mxu0 0.0
    %84 = vmatpush1.msra.mxu0 0.0
    %85 = vmatprep.subr.mxu0 0.0
    %86 = vmatpush1.msra.mxu0 0.0
    %87 = vmatprep.subr.mxu0 0.0
    %88 = vmatpush1.msra.mxu0 0.0
    %89 = vmatprep.subr.mxu0 0.0
    %90 = vmatpush1.msra.mxu0 0.0
    %91 = vmatprep.subr.mxu0 0.0
    %92 = vmatpush1.msra.mxu0 0.0
    %93 = vmatprep.subr.mxu0 0.0
    %94 = vmatpush1.msra.mxu0 0.0
    %95 = vmatprep.subr.mxu0 0.0
    %96 = vmatpush1.msra.mxu0 0.0
    %97 = vmatprep.subr.mxu0 0.0
    %98 = vmatpush1.msra.mxu0 0.0
    %99 = vmatprep.subr.mxu0 0.0
    %100 = vmatpush1.msra.mxu0 0.0
    %101 = vmatprep.subr.mxu0 0.0
    %102 = vmatpush1.msra.mxu0 0.0
    %103 = vmatprep.subr.mxu0 0.0
    %104 = vmatpush1.msra.mxu0 0.0
    %105 = vmatprep.subr.mxu0 0.0
    %106 = vmatpush1.msra.mxu0 0.0
    %107 = vmatprep.subr.mxu0 0.0
    %108 = vmatpush1.msra.mxu0 0.0
    %109 = vmatprep.subr.mxu0 0.0
    %110 = vmatpush1.msra.mxu0 0.0
    %111 = vmatprep.subr.mxu0 0.0
    %112 = vmatpush1.msra.mxu0 0.0
    %113 = vmatprep.subr.mxu0 0.0
    %114 = vmatpush1.msra.mxu0 0.0
    %115 = vmatprep.subr.mxu0 0.0
    %116 = vmatpush1.msra.mxu0 0.0
    %117 = vmatprep.mubr.f32.mxu0 0.0
    %118 = vmatmul.mubr.f32.gmra.mrb[0].mxu0 %v48
    %v119 = vpop.f32.mrb[0].mxu0
    %v120 = vadd.f32 0.0, %v119
    %v121 = vpop.f32.mrb[0].mxu0
    %122 = vmatprep.mubr.f32.mxu0 0.0
    %123 = vmatmul.mubr.f32.gmra.mrb[0].mxu0 %v51
    %v124 = vpop.f32.mrb[0].mxu0
    %v125 = vadd.f32 0.0, %v124
    %v126 = vpop.f32.mrb[0].mxu0
    %127 = vdwg.mxu0
    %129 = vrot.lane.b32.xlu0 %v120, 112
    %v130 = vpop.permute.xlu0 %129
    %vm131 = vcmask 130048
    %v132 = vsel %vm131, %v130, 0
    %v134 = vsel %vm131, %v120, 0
    %136 = vmatprep.subr.mxu0 0.0
    %137 = vmatpush1.xpose.msra.mxu0 %v134
    %138 = vmatprep.subr.mxu0 0.0
    %139 = vmatpush1.xpose.msra.mxu0 0.0
    %140 = vmatprep.subr.mxu0 0.0
    %141 = vmatpush1.xpose.msra.mxu0 0.0
    %142 = vmatprep.subr.mxu0 0.0
    %143 = vmatpush1.xpose.msra.mxu0 0.0
    %144 = vmatprep.subr.mxu0 0.0
    %145 = vmatpush1.xpose.msra.mxu0 0.0
    %146 = vmatprep.subr.mxu0 0.0
    %147 = vmatpush1.xpose.msra.mxu0 0.0
    %148 = vmatprep.subr.mxu0 0.0
    %149 = vmatpush1.xpose.msra.mxu0 0.0
    %150 = vmatprep.subr.mxu0 0.0
    %151 = vmatpush1.xpose.msra.mxu0 0.0
    %152 = vmatprep.subr.mxu0 0.0
    %153 = vmatpush1.xpose.msra.mxu0 0.0
    %154 = vmatprep.subr.mxu0 0.0
    %155 = vmatpush1.xpose.msra.mxu0 0.0
    %156 = vmatprep.subr.mxu0 0.0
    %157 = vmatpush1.xpose.msra.mxu0 0.0
    %158 = vmatprep.subr.mxu0 0.0
    %159 = vmatpush1.xpose.msra.mxu0 0.0
    %160 = vmatprep.subr.mxu0 0.0
    %161 = vmatpush1.xpose.msra.mxu0 0.0
    %162 = vmatprep.subr.mxu0 0.0
    %163 = vmatpush1.xpose.msra.mxu0 0.0
    %164 = vmatprep.subr.mxu0 0.0
    %165 = vmatpush1.xpose.msra.mxu0 0.0
    %166 = vmatprep.subr.mxu0 0.0
    %167 = vmatpush1.xpose.msra.mxu0 0.0
    %168 = vmatprep.subr.mxu0 0.0
    %169 = vmatpush1.xpose.msra.mxu0 0.0
    %170 = vmatprep.subr.mxu0 0.0
    %171 = vmatpush1.xpose.msra.mxu0 0.0
    %172 = vmatprep.subr.mxu0 0.0
    %173 = vmatpush1.xpose.msra.mxu0 0.0
    %174 = vmatprep.subr.mxu0 0.0
    %175 = vmatpush1.xpose.msra.mxu0 0.0
    %176 = vmatprep.subr.mxu0 0.0
    %177 = vmatpush1.xpose.msra.mxu0 0.0
    %178 = vmatprep.subr.mxu0 0.0
    %179 = vmatpush1.xpose.msra.mxu0 0.0
    %180 = vmatprep.subr.mxu0 0.0
    %181 = vmatpush1.xpose.msra.mxu0 0.0
    %182 = vmatprep.subr.mxu0 0.0
    %183 = vmatpush1.xpose.msra.mxu0 0.0
    %184 = vmatprep.subr.mxu0 0.0
    %185 = vmatpush1.xpose.msra.mxu0 0.0
    %186 = vmatprep.subr.mxu0 0.0
    %187 = vmatpush1.xpose.msra.mxu0 0.0
    %188 = vmatprep.subr.mxu0 0.0
    %189 = vmatpush1.xpose.msra.mxu0 0.0
    %190 = vmatprep.subr.mxu0 0.0
    %191 = vmatpush1.xpose.msra.mxu0 0.0
    %192 = vmatprep.subr.mxu0 0.0
    %193 = vmatpush1.xpose.msra.mxu0 0.0
    %194 = vmatprep.subr.mxu0 0.0
    %195 = vmatpush1.xpose.msra.mxu0 0.0
    %196 = vmatprep.subr.mxu0 0.0
    %197 = vmatpush1.xpose.msra.mxu0 0.0
    %198 = vmatprep.subr.mxu0 0.0
    %199 = vmatpush1.xpose.msra.mxu0 0.0
    %200 = vmatprep.mubr.f32.mxu0 0.0
    %201 = vmatmul.mubr.f32.gmra.mrb[0].mxu0 %v132
    %v202 = vpop.f32.mrb[0].mxu0
    %v203 = vadd.f32 0.0, %v202
    %v204 = vpop.f32.mrb[0].mxu0
    %205 = vdwg.mxu0
    %207 = vrot.lane.b32.xlu0 %v125, 112
    %v208 = vpop.permute.xlu0 %207
    %v209 = vsel %vm131, %v208, 0
    %v211 = vsel %vm131, %v125, 0
    %213 = vmatprep.subr.mxu0 0.0
    %214 = vmatpush1.xpose.msra.mxu0 %v211
    %215 = vmatprep.subr.mxu0 0.0
    %216 = vmatpush1.xpose.msra.mxu0 0.0
    %217 = vmatprep.subr.mxu0 0.0
    %218 = vmatpush1.xpose.msra.mxu0 0.0
    %219 = vmatprep.subr.mxu0 0.0
    %220 = vmatpush1.xpose.msra.mxu0 0.0
    %221 = vmatprep.subr.mxu0 0.0
    %222 = vmatpush1.xpose.msra.mxu0 0.0
    %223 = vmatprep.subr.mxu0 0.0
    %224 = vmatpush1.xpose.msra.mxu0 0.0
    %225 = vmatprep.subr.mxu0 0.0
    %226 = vmatpush1.xpose.msra.mxu0 0.0
    %227 = vmatprep.subr.mxu0 0.0
    %228 = vmatpush1.xpose.msra.mxu0 0.0
    %229 = vmatprep.subr.mxu0 0.0
    %230 = vmatpush1.xpose.msra.mxu0 0.0
    %231 = vmatprep.subr.mxu0 0.0
    %232 = vmatpush1.xpose.msra.mxu0 0.0
    %233 = vmatprep.subr.mxu0 0.0
    %234 = vmatpush1.xpose.msra.mxu0 0.0
    %235 = vmatprep.subr.mxu0 0.0
    %236 = vmatpush1.xpose.msra.mxu0 0.0
    %237 = vmatprep.subr.mxu0 0.0
    %238 = vmatpush1.xpose.msra.mxu0 0.0
    %239 = vmatprep.subr.mxu0 0.0
    %240 = vmatpush1.xpose.msra.mxu0 0.0
    %241 = vmatprep.subr.mxu0 0.0
    %242 = vmatpush1.xpose.msra.mxu0 0.0
    %243 = vmatprep.subr.mxu0 0.0
    %244 = vmatpush1.xpose.msra.mxu0 0.0
    %245 = vmatprep.subr.mxu0 0.0
    %246 = vmatpush1.xpose.msra.mxu0 0.0
    %247 = vmatprep.subr.mxu0 0.0
    %248 = vmatpush1.xpose.msra.mxu0 0.0
    %249 = vmatprep.subr.mxu0 0.0
    %250 = vmatpush1.xpose.msra.mxu0 0.0
    %251 = vmatprep.subr.mxu0 0.0
    %252 = vmatpush1.xpose.msra.mxu0 0.0
    %253 = vmatprep.subr.mxu0 0.0
    %254 = vmatpush1.xpose.msra.mxu0 0.0
    %255 = vmatprep.subr.mxu0 0.0
    %256 = vmatpush1.xpose.msra.mxu0 0.0
    %257 = vmatprep.subr.mxu0 0.0
    %258 = vmatpush1.xpose.msra.mxu0 0.0
    %259 = vmatprep.subr.mxu0 0.0
    %260 = vmatpush1.xpose.msra.mxu0 0.0
    %261 = vmatprep.subr.mxu0 0.0
    %262 = vmatpush1.xpose.msra.mxu0 0.0
    %263 = vmatprep.subr.mxu0 0.0
    %264 = vmatpush1.xpose.msra.mxu0 0.0
    %265 = vmatprep.subr.mxu0 0.0
    %266 = vmatpush1.xpose.msra.mxu0 0.0
    %267 = vmatprep.subr.mxu0 0.0
    %268 = vmatpush1.xpose.msra.mxu0 0.0
    %269 = vmatprep.subr.mxu0 0.0
    %270 = vmatpush1.xpose.msra.mxu0 0.0
    %271 = vmatprep.subr.mxu0 0.0
    %272 = vmatpush1.xpose.msra.mxu0 0.0
    %273 = vmatprep.subr.mxu0 0.0
    %274 = vmatpush1.xpose.msra.mxu0 0.0
    %275 = vmatprep.subr.mxu0 0.0
    %276 = vmatpush1.xpose.msra.mxu0 0.0
    %277 = vmatprep.mubr.f32.mxu0 0.0
    %278 = vmatmul.mubr.f32.gmra.mrb[0].mxu0 %v209
    %v279 = vpop.f32.mrb[0].mxu0
    %v280 = vadd.f32 0.0, %v279
    %v281 = vpop.f32.mrb[0].mxu0
    %282 = vdwg.mxu0
    %v283 = vlaneseq
    %v284 = vshrl.u32 %v283, 7
    %v285 = vlaneseq
    %v286 = vand.u32 %v285, 127
    %vm287 = vcmp.ge.s32.totalorder %v284, %v286
    %v288 = vsel %vm287, %v203, -inf
    %v289 = vsel %vm287, %v280, -inf
    %vm290 = vcmask 64512
    %v291 = vsel %vm290, %v288, -inf
    %292 = vmax.xlane.f32.xlu0 %v291
    %v293 = vpop.xlane.xlu0 %292
    %v294 = vsel %vm290, %v289, -inf
    %295 = vmax.xlane.f32.xlu0 %v294
    %v296 = vpop.xlane.xlu0 %295
    %v297 = vsub.f32 %v288, %v293
    %v298 = vsub.f32 %v289, %v296
    %v299 = vmul.f32 %v297, 1.442695
    %v300 = vpow.pop %v299
    %v301 = vmul.f32 %v298, 1.442695
    %v302 = vpow.pop %v301
    %v303 = vsel %vm290, %v300, 0.0
    %304 = vadd.xlane.f32.xlu0 %v303
    %v305 = vpop.xlane.xlu0 %304
    %v306 = vsel %vm290, %v302, 0.0
    %307 = vadd.xlane.f32.xlu0 %v306
    %v308 = vpop.xlane.xlu0 %307
    %v309 = vrcp.pop %v305
    %v310 = vrcp.pop %v308
    %v311 = vmul.f32 %v300, %v309
    %v312 = vmul.f32 %v302, %v310
    %313 = vrot.lane.b32.xlu0 %v120, 96
    %v314 = vpop.permute.xlu0 %313
    %v317 = vsel %vm290, %v311, 0
    %319 = vmatprep.subr.mxu0 0.0
    %320 = vmatpush1.msra.mxu0 %v314
    %321 = vmatprep.subr.mxu0 0.0
    %322 = vmatpush1.msra.mxu0 0.0
    %323 = vmatprep.subr.mxu0 0.0
    %324 = vmatpush1.msra.mxu0 0.0
    %325 = vmatprep.subr.mxu0 0.0
    %326 = vmatpush1.msra.mxu0 0.0
    %327 = vmatprep.subr.mxu0 0.0
    %328 = vmatpush1.msra.mxu0 0.0
    %329 = vmatprep.subr.mxu0 0.0
    %330 = vmatpush1.msra.mxu0 0.0
    %331 = vmatprep.subr.mxu0 0.0
    %332 = vmatpush1.msra.mxu0 0.0
    %333 = vmatprep.subr.mxu0 0.0
    %334 = vmatpush1.msra.mxu0 0.0
    %335 = vmatprep.subr.mxu0 0.0
    %336 = vmatpush1.msra.mxu0 0.0
    %337 = vmatprep.subr.mxu0 0.0
    %338 = vmatpush1.msra.mxu0 0.0
    %339 = vmatprep.subr.mxu0 0.0
    %340 = vmatpush1.msra.mxu0 0.0
    %341 = vmatprep.subr.mxu0 0.0
    %342 = vmatpush1.msra.mxu0 0.0
    %343 = vmatprep.subr.mxu0 0.0
    %344 = vmatpush1.msra.mxu0 0.0
    %345 = vmatprep.subr.mxu0 0.0
    %346 = vmatpush1.msra.mxu0 0.0
    %347 = vmatprep.subr.mxu0 0.0
    %348 = vmatpush1.msra.mxu0 0.0
    %349 = vmatprep.subr.mxu0 0.0
    %350 = vmatpush1.msra.mxu0 0.0
    %351 = vmatprep.subr.mxu0 0.0
    %352 = vmatpush1.msra.mxu0 0.0
    %353 = vmatprep.subr.mxu0 0.0
    %354 = vmatpush1.msra.mxu0 0.0
    %355 = vmatprep.subr.mxu0 0.0
    %356 = vmatpush1.msra.mxu0 0.0
    %357 = vmatprep.subr.mxu0 0.0
    %358 = vmatpush1.msra.mxu0 0.0
    %359 = vmatprep.subr.mxu0 0.0
    %360 = vmatpush1.msra.mxu0 0.0
    %361 = vmatprep.subr.mxu0 0.0
    %362 = vmatpush1.msra.mxu0 0.0
    %363 = vmatprep.subr.mxu0 0.0
    %364 = vmatpush1.msra.mxu0 0.0
    %365 = vmatprep.subr.mxu0 0.0
    %366 = vmatpush1.msra.mxu0 0.0
    %367 = vmatprep.subr.mxu0 0.0
    %368 = vmatpush1.msra.mxu0 0.0
    %369 = vmatprep.subr.mxu0 0.0
    %370 = vmatpush1.msra.mxu0 0.0
    %371 = vmatprep.subr.mxu0 0.0
    %372 = vmatpush1.msra.mxu0 0.0
    %373 = vmatprep.subr.mxu0 0.0
    %374 = vmatpush1.msra.mxu0 0.0
    %375 = vmatprep.subr.mxu0 0.0
    %376 = vmatpush1.msra.mxu0 0.0
    %377 = vmatprep.subr.mxu0 0.0
    %378 = vmatpush1.msra.mxu0 0.0
    %379 = vmatprep.subr.mxu0 0.0
    %380 = vmatpush1.msra.mxu0 0.0
    %381 = vmatprep.subr.mxu0 0.0
    %382 = vmatpush1.msra.mxu0 0.0
    %383 = vmatprep.mubr.f32.mxu0 0.0
    %384 = vmatmul.mubr.f32.gmra.mrb[0].mxu0 %v317
    %v385 = vpop.f32.mrb[0].mxu0
    %v386 = vadd.f32 0.0, %v385
    %v387 = vpop.f32.mrb[0].mxu0
    %388 = vdwg.mxu0
    %389 = vrot.lane.b32.xlu0 %v125, 96
    %v390 = vpop.permute.xlu0 %389
    %v393 = vsel %vm290, %v312, 0
    %395 = vmatprep.subr.mxu0 0.0
    %396 = vmatpush1.msra.mxu0 %v390
    %397 = vmatprep.subr.mxu0 0.0
    %398 = vmatpush1.msra.mxu0 0.0
    %399 = vmatprep.subr.mxu0 0.0
    %400 = vmatpush1.msra.mxu0 0.0
    %401 = vmatprep.subr.mxu0 0.0
    %402 = vmatpush1.msra.mxu0 0.0
    %403 = vmatprep.subr.mxu0 0.0
    %404 = vmatpush1.msra.mxu0 0.0
    %405 = vmatprep.subr.mxu0 0.0
    %406 = vmatpush1.msra.mxu0 0.0
    %407 = vmatprep.subr.mxu0 0.0
    %408 = vmatpush1.msra.mxu0 0.0
    %409 = vmatprep.subr.mxu0 0.0
    %410 = vmatpush1.msra.mxu0 0.0
    %411 = vmatprep.subr.mxu0 0.0
    %412 = vmatpush1.msra.mxu0 0.0
    %413 = vmatprep.subr.mxu0 0.0
    %414 = vmatpush1.msra.mxu0 0.0
    %415 = vmatprep.subr.mxu0 0.0
    %416 = vmatpush1.msra.mxu0 0.0
    %417 = vmatprep.subr.mxu0 0.0
    %418 = vmatpush1.msra.mxu0 0.0
    %419 = vmatprep.subr.mxu0 0.0
    %420 = vmatpush1.msra.mxu0 0.0
    %421 = vmatprep.subr.mxu0 0.0
    %422 = vmatpush1.msra.mxu0 0.0
    %423 = vmatprep.subr.mxu0 0.0
    %424 = vmatpush1.msra.mxu0 0.0
    %425 = vmatprep.subr.mxu0 0.0
    %426 = vmatpush1.msra.mxu0 0.0
    %427 = vmatprep.subr.mxu0 0.0
    %428 = vmatpush1.msra.mxu0 0.0
    %429 = vmatprep.subr.mxu0 0.0
    %430 = vmatpush1.msra.mxu0 0.0
    %431 = vmatprep.subr.mxu0 0.0
    %432 = vmatpush1.msra.mxu0 0.0
    %433 = vmatprep.subr.mxu0 0.0
    %434 = vmatpush1.msra.mxu0 0.0
    %435 = vmatprep.subr.mxu0 0.0
    %436 = vmatpush1.msra.mxu0 0.0
    %437 = vmatprep.subr.mxu0 0.0
    %438 = vmatpush1.msra.mxu0 0.0
    %439 = vmatprep.subr.mxu0 0.0
    %440 = vmatpush1.msra.mxu0 0.0
    %441 = vmatprep.subr.mxu0 0.0
    %442 = vmatpush1.msra.mxu0 0.0
    %443 = vmatprep.subr.mxu0 0.0
    %444 = vmatpush1.msra.mxu0 0.0
    %445 = vmatprep.subr.mxu0 0.0
    %446 = vmatpush1.msra.mxu0 0.0
    %447 = vmatprep.subr.mxu0 0.0
    %448 = vmatpush1.msra.mxu0 0.0
    %449 = vmatprep.subr.mxu0 0.0
    %450 = vmatpush1.msra.mxu0 0.0
    %451 = vmatprep.subr.mxu0 0.0
    %452 = vmatpush1.msra.mxu0 0.0
    %453 = vmatprep.subr.mxu0 0.0
    %454 = vmatpush1.msra.mxu0 0.0
    %455 = vmatprep.subr.mxu0 0.0
    %456 = vmatpush1.msra.mxu0 0.0
    %457 = vmatprep.subr.mxu0 0.0
    %458 = vmatpush1.msra.mxu0 0.0
    %459 = vmatprep.mubr.f32.mxu0 0.0
    %460 = vmatmul.mubr.f32.gmra.mrb[0].mxu0 %v393
    %v461 = vpop.f32.mrb[0].mxu0
    %v462 = vadd.f32 0.0, %v461
    %v463 = vpop.f32.mrb[0].mxu0
    %464 = vdwg.mxu0
    %465 = vst.msk [vmem:[#allocation7] sm:$0xff] %vm131, %v386
    %466 = vst.msk [vmem:[#allocation7 + $0x8] sm:$0xff] %vm131, %v462
    // Predicated region
    $region18: #{tpu_custom_call.1} parent=1 // pred_check
      _
    $region19: #{tpu_custom_call.1} parent=1 // pred_check_branch
      %468 = sbr.rel (0) target = $region21
    $region20: #{tpu_custom_call.1} parent=1 // pred_region
      %s470 = ssub.s32 256, 256
      %471 = vsyncadd [#allocation4], %s470
      %s472 = sshll.u32 [#allocation7], 4
      %s473 = int_to_ptr.vmem [resolvable:$true] %s472
      %478 = dma.vmem_to_hbm [thread:$0]  %s473, 256, %s2, [#allocation4], 128, 128, 8
    $region21: #{tpu_custom_call.1} parent=1 // pred_fallthru
      _
    // Predicated region
    $region22: #{tpu_custom_call.1} parent=1 // pred_check
      _
    $region23: #{tpu_custom_call.1} parent=1 // pred_check_branch
      %480 = sbr.rel (0) target = $region25
    $region24: #{tpu_custom_call.1} parent=1 // pred_region
      %481 = dma.done [#allocation4], 256
    $region25: #{tpu_custom_call.1} parent=1 // pred_fallthru
      _
    %482 = vsyncpa [#allocation3], 1
    %483 = vsyncpa [#allocation6], 1
    %484 = vsyncpa [#allocation4], 1

</llo_original>
